<compile_context>
chip_gen: v7x
topology: tpu7x:2x2x1
jax: 0.10.0
libtpu: 0.0.40
codegen_flags: <defaults>
</compile_context>

<pallas_src>
import jax
import jax.numpy as jnp
from jax.experimental import pallas as pl
from jax.experimental.pallas import tpu as pltpu

BN_EPS = 1e-5


def _round_up(a, b):
    return (a + b - 1) // b * b


def _vmem_capacity_bytes():
    """Physical VMEM of the current chip; conservative v7x default if unknown."""
    try:
        info = pltpu.get_tpu_info()
        cap = getattr(info, "vmem_capacity_bytes", None)
        if cap:
            return int(cap)
    except Exception:
        pass
    return 64 * 1024 * 1024


# -----------------------------------------------------------------------------
# Fused kernel: grid = (pass, tile).  h^T lives in VMEM scratch, never in HBM.
# -----------------------------------------------------------------------------
def drnet_fused_kernel(n_ref, x_ref, w1_ref, bn_ref, w2_ref, b2_ref, out_ref,
                       ht_ref, hsum_ref, hsq_ref, scale_ref, shift_ref):
    # n_ref:     (1,)  int32 SMEM     true batch size (scalar prefetch)
    # x_ref:     (TN, F)              batch tile (pass 0 only)
    # w1_ref:    (16, F)              fc1 weight (resident)
    # bn_ref:    (16, 2)              [:,0]=gamma, [:,1]=beta
    # w2_ref:    (1, 16), b2_ref: (1, 1)
    # out_ref:   (1, TN)              lane-dense output slab (pass 1 only)
    # ht_ref:    (n_tiles, 16, TN)    VMEM-resident h^T
    # hsum_ref / hsq_ref: (16, 1)     full-batch sum / sum-of-squares of h
    # scale_ref / shift_ref: (16, 1)  folded BN affine (computed once)
    p = pl.program_id(0)   # 0: fc1 + stats, 1: BN + ReLU + fc2
    t = pl.program_id(1)   # batch tile

    @pl.when((p == 0) & (t == 0))
    def _init():
        hsum_ref[...] = jnp.zeros_like(hsum_ref)
        hsq_ref[...] = jnp.zeros_like(hsq_ref)

    @pl.when(p == 0)
    def _fc1_and_stats():
        # h^T = w1 @ x^T (contract over F) -> batch on the lane axis, no
        # in-kernel transpose.  Zero-padded rows contribute 0 to both sums.
        ht = jax.lax.dot_general(
            w1_ref[...], x_ref[...],
            dimension_numbers=(((1,), (1,)), ((), ())),
            preferred_element_type=jnp.float32)            # (16, TN)
        ht_ref[t] = ht
        hsum_ref[...] += jnp.sum(ht, axis=1, keepdims=True)
        hsq_ref[...] += jnp.sum(ht * ht, axis=1, keepdims=True)

    @pl.when((p == 1) & (t == 0))
    def _fold_bn():
        # BN fold hoisted out of the per-tile body: one-pass mean / variance
        # over the TRUE batch count (clamped against cancellation).
        inv_n = 1.0 / n_ref[0].astype(jnp.float32)
        mean = hsum_ref[...] * inv_n
        var = jnp.maximum(hsq_ref[...] * inv_n - mean * mean, 0.0)
        scale = bn_ref[:, 0:1] * jax.lax.rsqrt(var + BN_EPS)
        scale_ref[...] = scale
        shift_ref[...] = bn_ref[:, 1:2] - mean * scale

    @pl.when(p == 1)
    def _bn_relu_fc2():
        h = jnp.maximum(ht_ref[t] * scale_ref[...] + shift_ref[...], 0.0)
        out = jnp.dot(w2_ref[...], h, preferred_element_type=jnp.float32)
        out_ref[...] = (out + b2_ref[...]).astype(out_ref.dtype)


# -----------------------------------------------------------------------------
# Fallback pass 1: fc1 (bias-free) statistics only (sum / sumsq of h).
# -----------------------------------------------------------------------------
def fc1_stats_kernel(x_ref, w1_ref, hsum_ref, hsq_ref):
    @pl.when(pl.program_id(0) == 0)
    def _init():
        hsum_ref[...] = jnp.zeros_like(hsum_ref)
        hsq_ref[...] = jnp.zeros_like(hsq_ref)

    ht = jax.lax.dot_general(
        w1_ref[...], x_ref[...],
        dimension_numbers=(((1,), (1,)), ((), ())),
        preferred_element_type=jnp.float32)                # (16, TN)
    hsum_ref[...] += jnp.sum(ht, axis=1, keepdims=True)
    hsq_ref[...] += jnp.sum(ht * ht, axis=1, keepdims=True)


# -----------------------------------------------------------------------------
# Fallback pass 2: recompute h from x, folded-BN FMA + ReLU + fc2.
# -----------------------------------------------------------------------------
def fc1_bn_relu_fc2_kernel(x_ref, w1_ref, ss_ref, w2_ref, b2_ref, out_ref):
    ht = jax.lax.dot_general(
        w1_ref[...], x_ref[...],
        dimension_numbers=(((1,), (1,)), ((), ())),
        preferred_element_type=jnp.float32)                # (16, TN)
    h = jnp.maximum(ht * ss_ref[:, 0:1] + ss_ref[:, 1:2], 0.0)
    out = jnp.dot(w2_ref[...], h, preferred_element_type=jnp.float32)
    out_ref[...] = (out + b2_ref[...]).astype(out_ref.dtype)


# -----------------------------------------------------------------------------
# Wrapper
# -----------------------------------------------------------------------------
def drnet_forward(x, w1, b1, gamma, beta, w2, b2, *, block_n=None,
                  force_two_pass=False):
    """DRNet forward. x: (N, F) float32 -> (N, 1) float32."""
    n, f = x.shape
    hidden = w1.shape[0]   # 16
    out_dim = w2.shape[0]  # 1
    # fc1 bias is algebraically cancelled by the training-mode batch-mean
    # subtraction of the BatchNorm immediately after it -> dead compute.
    del b1

    f_pad = _round_up(f, 128)   # lane-padded row width (what VMEM really holds)

    if block_n is None:
        # ~8 MiB budget for the double-buffered, lane-padded x tile.
        cap = (8 * 1024 * 1024) // (2 * f_pad * 4)
        block_n = min(8192, max(128, (cap // 128) * 128))
    block_n = max(128, (block_n // 128) * 128)
    # Keep >= 2 tiles when the batch allows it (v7x megacore on the tile axis).
    two_tile_cap = max(128, _round_up((n + 1) // 2, 128))
    block_n = min(block_n, two_tile_cap)

    n_pad = _round_up(n, block_n)
    n_tiles = n_pad // block_n

    # Zero padding rows contribute 0 to sum/sumsq; true n is used for stats.
    x_p = x if n_pad == n else jnp.pad(x, ((0, n_pad - n), (0, 0)))

    bn = jnp.stack([gamma, beta], axis=1)        # (16, 2) packed small params
    w2_2d = w2.reshape(out_dim, hidden)          # (1, 16)
    b2_2d = b2.reshape(out_dim, 1)               # (1, 1)

    # ---- VMEM sizing (lane-padded, double-buffered) ----
    vmem_cap = _vmem_capacity_bytes()
    x_bufs = 2 * block_n * f_pad * 4                       # double-buffered x
    out_bufs = 2 * 8 * block_n * 4                         # (1,TN) pads to 8 sublanes
    ht_bytes = n_tiles * hidden * block_n * 4              # VMEM-resident h^T
    small = 2 * 1024 * 1024                                # weights, accums, slack

    fused_need = ht_bytes + x_bufs + out_bufs + small
    use_fused = (not force_two_pass) and fused_need <= int(0.75 * vmem_cap)
    need = fused_need if use_fused else (x_bufs + out_bufs + small)
    vmem_limit = int(min(max(need, 16 * 1024 * 1024), int(0.9 * vmem_cap)))

    if use_fused:
        # ---- single fused call: grid = (pass, tile), only (1, N) hits HBM ----
        n_arr = jnp.array([n], dtype=jnp.int32)
        out_t = pl.pallas_call(
            drnet_fused_kernel,
            out_shape=jax.ShapeDtypeStruct((out_dim, n_pad), jnp.float32),
            grid_spec=pltpu.PrefetchScalarGridSpec(
                num_scalar_prefetch=1,
                grid=(2, n_tiles),
                in_specs=[
                    # x: tile t in pass 0; pinned to tile 0 in pass 1 (no re-DMA)
                    pl.BlockSpec((block_n, f), lambda p, t, n_s: (t * (1 - p), 0)),
                    pl.BlockSpec((hidden, f), lambda p, t, n_s: (0, 0)),      # w1
                    pl.BlockSpec((hidden, 2), lambda p, t, n_s: (0, 0)),      # gamma/beta
                    pl.BlockSpec((out_dim, hidden), lambda p, t, n_s: (0, 0)),# w2
                    pl.BlockSpec((out_dim, 1), lambda p, t, n_s: (0, 0)),     # b2
                ],
                # out stays on block 0 (no flush) during pass 0, rotates in pass 1
                out_specs=pl.BlockSpec((out_dim, block_n),
                                       lambda p, t, n_s: (0, t * p)),
                scratch_shapes=[
                    pltpu.VMEM((n_tiles, hidden, block_n), jnp.float32),  # h^T
                    pltpu.VMEM((hidden, 1), jnp.float32),                 # sum h
                    pltpu.VMEM((hidden, 1), jnp.float32),                 # sum h^2
                    pltpu.VMEM((hidden, 1), jnp.float32),                 # scale
                    pltpu.VMEM((hidden, 1), jnp.float32),                 # shift
                ]),
            compiler_params=pltpu.CompilerParams(
                dimension_semantics=("arbitrary", "arbitrary"),
                vmem_limit_bytes=vmem_limit),
        )(n_arr, x_p, w1, bn, w2_2d, b2_2d)
    else:
        # ---- fallback: stats pass, then recompute-h pass (no h^T anywhere) ----
        hsum, hsq = pl.pallas_call(
            fc1_stats_kernel,
            out_shape=(jax.ShapeDtypeStruct((hidden, 1), jnp.float32),
                       jax.ShapeDtypeStruct((hidden, 1), jnp.float32)),
            grid_spec=pltpu.PrefetchScalarGridSpec(
                num_scalar_prefetch=0,
                grid=(n_tiles,),
                in_specs=[pl.BlockSpec((block_n, f), lambda t: (t, 0)),
                          pl.BlockSpec((hidden, f), lambda t: (0, 0))],
                out_specs=(pl.BlockSpec((hidden, 1), lambda t: (0, 0)),
                           pl.BlockSpec((hidden, 1), lambda t: (0, 0)))),
            compiler_params=pltpu.CompilerParams(
                dimension_semantics=("arbitrary",),   # resident accumulators
                vmem_limit_bytes=vmem_limit),
        )(x_p, w1)

        # BN fold once on (16,) vectors in plain JAX (hoisted out of the kernel).
        inv_n = 1.0 / float(n)
        mean = hsum * inv_n
        var = jnp.maximum(hsq * inv_n - mean * mean, 0.0)
        scale = gamma.reshape(hidden, 1) * jax.lax.rsqrt(var + BN_EPS)
        shift = beta.reshape(hidden, 1) - mean * scale
        ss = jnp.concatenate([scale, shift], axis=1)   # (16, 2)

        out_t = pl.pallas_call(
            fc1_bn_relu_fc2_kernel,
            out_shape=jax.ShapeDtypeStruct((out_dim, n_pad), jnp.float32),
            grid_spec=pltpu.PrefetchScalarGridSpec(
                num_scalar_prefetch=0,
                grid=(n_tiles,),
                in_specs=[pl.BlockSpec((block_n, f), lambda t: (t, 0)),
                          pl.BlockSpec((hidden, f), lambda t: (0, 0)),
                          pl.BlockSpec((hidden, 2), lambda t: (0, 0)),
                          pl.BlockSpec((out_dim, hidden), lambda t: (0, 0)),
                          pl.BlockSpec((out_dim, 1), lambda t: (0, 0))],
                out_specs=pl.BlockSpec((out_dim, block_n), lambda t: (0, t))),
            compiler_params=pltpu.CompilerParams(
                dimension_semantics=("parallel",),     # tiles independent -> megacore
                vmem_limit_bytes=vmem_limit),
        )(x_p, w1, ss, w2_2d, b2_2d)

    # lane-dense (1, N_pad) slab -> module's (N, 1) column (wrapper plumbing).
    return out_t[:, :n].T


def init_params(key, feature_dim, hidden=16, out_dim=1):
    """Deterministic PyTorch-style (uniform fan_in) init."""
    k1, k2, k3, k4 = jax.random.split(key, 4)
    bound1 = 1.0 / (feature_dim ** 0.5)
    w1 = jax.random.uniform(k1, (hidden, feature_dim), jnp.float32,
                            -bound1, bound1)
    b1 = jax.random.uniform(k2, (hidden,), jnp.float32, -bound1, bound1)
    gamma = jnp.ones((hidden,), jnp.float32)
    beta = jnp.zeros((hidden,), jnp.float32)
    bound2 = 1.0 / (hidden ** 0.5)
    w2 = jax.random.uniform(k3, (out_dim, hidden), jnp.float32,
                            -bound2, bound2)
    b2 = jax.random.uniform(k4, (out_dim,), jnp.float32, -bound2, bound2)
    return w1, b1, gamma, beta, w2, b2


def drnet_reference(x, w1, b1, gamma, beta, w2, b2):
    h = x @ w1.T + b1
    mean = jnp.mean(h, axis=0, keepdims=True)
    var = jnp.mean((h - mean) ** 2, axis=0, keepdims=True)
    h = (h - mean) / jnp.sqrt(var + BN_EPS) * gamma + beta
    h = jnp.maximum(h, 0.0)
    return h @ w2.T + b2


if __name__ == "__main__":
    key = jax.random.PRNGKey(0)
    kx, kp = jax.random.split(key)

    batch, feature_dim = 8, 32
    x = jax.random.normal(kx, (batch, feature_dim), dtype=jnp.float32)
    params = init_params(kp, feature_dim)

    out = jax.block_until_ready(drnet_forward(x, *params))
    ref = drnet_reference(x, *params)
    assert out.shape == (batch, 1)
    assert jnp.allclose(out, ref, atol=1e-4, rtol=1e-4), (out, ref)

    # Multi-tile fused path + padded batch (cross-tile BN statistics).
    batch2 = 300
    x2 = jax.random.normal(jax.random.PRNGKey(1), (batch2, feature_dim),
                           dtype=jnp.float32)
    out2 = jax.block_until_ready(drnet_forward(x2, *params, block_n=128))
    ref2 = drnet_reference(x2, *params)
    assert out2.shape == (batch2, 1)
    assert jnp.allclose(out2, ref2, atol=1e-4, rtol=1e-4), (out2, ref2)

    # Fallback two-pass recompute path (used when h^T would not fit in VMEM).
    out3 = jax.block_until_ready(
        drnet_forward(x2, *params, block_n=128, force_two_pass=True))
    assert out3.shape == (batch2, 1)
    assert jnp.allclose(out3, ref2, atol=1e-4, rtol=1e-4), (out3, ref2)

    # NOTE: PyTorch BatchNorm1d.forward() in train mode also updates
    # running_mean/running_var buffers as a side effect; the forward output
    # does not depend on them, so this kernel intentionally omits that update.
    print("KERNEL_OK")
</pallas_src>

<mosaic_0001>
module attributes {stable_mosaic.version = 11 : i64} {
  func.func @drnet_fused_kernel(%arg0: i32, %arg1: i32, %arg2: memref<1xi32, #tpu.memory_space<smem>>, %arg3: memref<128x32xf32, #tpu.memory_space<vmem>>, %arg4: memref<16x32xf32, #tpu.memory_space<vmem>>, %arg5: memref<16x2xf32, #tpu.memory_space<vmem>>, %arg6: memref<1x16xf32, #tpu.memory_space<vmem>>, %arg7: memref<1x1xf32, #tpu.memory_space<vmem>>, %arg8: memref<1x128xf32, #tpu.memory_space<vmem>>, %arg9: memref<1x16x128xf32, #tpu.memory_space<vmem>>, %arg10: memref<16x1xf32, #tpu.memory_space<vmem>>, %arg11: memref<16x1xf32, #tpu.memory_space<vmem>>, %arg12: memref<16x1xf32, #tpu.memory_space<vmem>>, %arg13: memref<16x1xf32, #tpu.memory_space<vmem>>) attributes {dimension_semantics = [#tpu.dimension_semantics<arbitrary>, #tpu.dimension_semantics<arbitrary>], iteration_bounds = array<i64: 2, 1>, scalar_prefetch = 1 : i64, scratch_operands = 5 : i64, tpu.core_type = #tpu.core_type<tc>, window_params = [{transform_indices = @transform_0, window_bounds = array<i64: 128, 32>}, {pipeline_mode = #tpu.pipeline_mode<synchronous>, transform_indices = @transform_1, window_bounds = array<i64: 16, 32>}, {pipeline_mode = #tpu.pipeline_mode<synchronous>, transform_indices = @transform_2, window_bounds = array<i64: 16, 2>}, {pipeline_mode = #tpu.pipeline_mode<synchronous>, transform_indices = @transform_3, window_bounds = array<i64: 1, 16>}, {pipeline_mode = #tpu.pipeline_mode<synchronous>, transform_indices = @transform_4, window_bounds = array<i64: 1, 1>}, {transform_indices = @transform_5, window_bounds = array<i64: 1, 128>}]} {
    %c0_i32 = arith.constant 0 : i32
    %0 = arith.cmpi eq, %arg0, %c0_i32 : i32
    %c0_i32_0 = arith.constant 0 : i32
    %1 = arith.cmpi eq, %arg1, %c0_i32_0 : i32
    %2 = arith.andi %0, %1 : i1
    %3 = arith.extui %2 : i1 to i32
    %c0_i32_1 = arith.constant 0 : i32
    %4 = arith.cmpi ne, %3, %c0_i32_1 : i32
    scf.if %4 {
      %cst = arith.constant 0.000000e+00 : f32
      %16 = vector.broadcast %cst : f32 to vector<16x1xf32>
      %c0 = arith.constant 0 : index
      %c0_8 = arith.constant 0 : index
      %17 = vector.load %arg10[%c0, %c0_8] : memref<16x1xf32, #tpu.memory_space<vmem>>, vector<16x1xf32>
      tpu.vector_store %arg10[%c0, %c0_8], %16 {strides = array<i32>} : memref<16x1xf32, #tpu.memory_space<vmem>>, vector<16x1xf32>,
      %cst_9 = arith.constant 0.000000e+00 : f32
      %18 = vector.broadcast %cst_9 : f32 to vector<16x1xf32>
      %c0_10 = arith.constant 0 : index
      %c0_11 = arith.constant 0 : index
      %19 = vector.load %arg11[%c0_10, %c0_11] : memref<16x1xf32, #tpu.memory_space<vmem>>, vector<16x1xf32>
      tpu.vector_store %arg11[%c0_10, %c0_11], %18 {strides = array<i32>} : memref<16x1xf32, #tpu.memory_space<vmem>>, vector<16x1xf32>,
    } else {
    }
    %c0_i32_2 = arith.constant 0 : i32
    %5 = arith.cmpi eq, %arg0, %c0_i32_2 : i32
    %6 = arith.extui %5 : i1 to i32
    %c0_i32_3 = arith.constant 0 : i32
    %7 = arith.cmpi ne, %6, %c0_i32_3 : i32
    scf.if %7 {
      %c0 = arith.constant 0 : index
      %c0_8 = arith.constant 0 : index
      %16 = vector.load %arg4[%c0, %c0_8] : memref<16x32xf32, #tpu.memory_space<vmem>>, vector<16x32xf32>
      %c0_9 = arith.constant 0 : index
      %c0_10 = arith.constant 0 : index
      %17 = vector.load %arg3[%c0_9, %c0_10] : memref<128x32xf32, #tpu.memory_space<vmem>>, vector<128x32xf32>
      %cst = arith.constant dense<0.000000e+00> : vector<16x128xf32>
      %18 = tpu.matmul %16, %17, %cst {dimension_numbers = #tpu.dot_dimension_numbers<[1], [1], [0], [0], [0, 0, 1, 0], [], []>} : vector<16x32xf32>, vector<128x32xf32>, vector<16x128xf32> -> vector<16x128xf32>
      %19 = arith.index_cast %arg1 : i32 to index
      %c0_11 = arith.constant 0 : index
      %c0_12 = arith.constant 0 : index
      %20 = vector.load %arg9[%19, %c0_11, %c0_12] : memref<1x16x128xf32, #tpu.memory_space<vmem>>, vector<1x16x128xf32>
      %21 = vector.shape_cast %20 : vector<1x16x128xf32> to vector<16x128xf32>
      %22 = vector.shape_cast %18 : vector<16x128xf32> to vector<1x16x128xf32>
      tpu.vector_store %arg9[%19, %c0_11, %c0_12], %22 {strides = array<i32>} : memref<1x16x128xf32, #tpu.memory_space<vmem>>, vector<1x16x128xf32>,
      %c0_13 = arith.constant 0 : index
      %c0_14 = arith.constant 0 : index
      %23 = vector.load %arg10[%c0_13, %c0_14] : memref<16x1xf32, #tpu.memory_space<vmem>>, vector<16x1xf32>
      %cst_15 = arith.constant dense<0.000000e+00> : vector<16xf32>
      %24 = vector.multi_reduction <add>, %18, %cst_15 [1] : vector<16x128xf32> to vector<16xf32>
      %25 = vector.shape_cast %24 : vector<16xf32> to vector<16x1xf32>
      %26 = arith.addf %23, %25 : vector<16x1xf32>
      %c0_16 = arith.constant 0 : index
      %c0_17 = arith.constant 0 : index
      %27 = vector.load %arg10[%c0_16, %c0_17] : memref<16x1xf32, #tpu.memory_space<vmem>>, vector<16x1xf32>
      tpu.vector_store %arg10[%c0_16, %c0_17], %26 {strides = array<i32>} : memref<16x1xf32, #tpu.memory_space<vmem>>, vector<16x1xf32>,
      %c0_18 = arith.constant 0 : index
      %c0_19 = arith.constant 0 : index
      %28 = vector.load %arg11[%c0_18, %c0_19] : memref<16x1xf32, #tpu.memory_space<vmem>>, vector<16x1xf32>
      %29 = arith.mulf %18, %18 : vector<16x128xf32>
      %cst_20 = arith.constant dense<0.000000e+00> : vector<16xf32>
      %30 = vector.multi_reduction <add>, %29, %cst_20 [1] : vector<16x128xf32> to vector<16xf32>
      %31 = vector.shape_cast %30 : vector<16xf32> to vector<16x1xf32>
      %32 = arith.addf %28, %31 : vector<16x1xf32>
      %c0_21 = arith.constant 0 : index
      %c0_22 = arith.constant 0 : index
      %33 = vector.load %arg11[%c0_21, %c0_22] : memref<16x1xf32, #tpu.memory_space<vmem>>, vector<16x1xf32>
      tpu.vector_store %arg11[%c0_21, %c0_22], %32 {strides = array<i32>} : memref<16x1xf32, #tpu.memory_space<vmem>>, vector<16x1xf32>,
    } else {
    }
    %c1_i32 = arith.constant 1 : i32
    %8 = arith.cmpi eq, %arg0, %c1_i32 : i32
    %c0_i32_4 = arith.constant 0 : i32
    %9 = arith.cmpi eq, %arg1, %c0_i32_4 : i32
    %10 = arith.andi %8, %9 : i1
    %11 = arith.extui %10 : i1 to i32
    %c0_i32_5 = arith.constant 0 : i32
    %12 = arith.cmpi ne, %11, %c0_i32_5 : i32
    scf.if %12 {
      %c0 = arith.constant 0 : index
      %16 = memref.load %arg2[%c0] : memref<1xi32, #tpu.memory_space<smem>>
      %17 = arith.sitofp %16 : i32 to f32
      %cst = arith.constant 1.000000e+00 : f32
      %18 = arith.divf %cst, %17 : f32
      %c0_8 = arith.constant 0 : index
      %c0_9 = arith.constant 0 : index
      %19 = vector.load %arg10[%c0_8, %c0_9] : memref<16x1xf32, #tpu.memory_space<vmem>>, vector<16x1xf32>
      %20 = vector.broadcast %18 : f32 to vector<16x1xf32>
      %21 = arith.mulf %19, %20 : vector<16x1xf32>
      %c0_10 = arith.constant 0 : index
      %c0_11 = arith.constant 0 : index
      %22 = vector.load %arg11[%c0_10, %c0_11] : memref<16x1xf32, #tpu.memory_space<vmem>>, vector<16x1xf32>
      %23 = vector.broadcast %18 : f32 to vector<16x1xf32>
      %24 = arith.mulf %22, %23 : vector<16x1xf32>
      %25 = arith.mulf %21, %21 : vector<16x1xf32>
      %26 = arith.subf %24, %25 : vector<16x1xf32>
      %cst_12 = arith.constant 0.000000e+00 : f32
      %27 = vector.broadcast %cst_12 : f32 to vector<16x1xf32>
      %28 = arith.maximumf %26, %27 : vector<16x1xf32>
      %c0_13 = arith.constant 0 : index
      %c0_14 = arith.constant 0 : index
      %29 = vector.load %arg5[%c0_13, %c0_14] : memref<16x2xf32, #tpu.memory_space<vmem>>, vector<16x1xf32>
      %cst_15 = arith.constant 9.99999974E-6 : f32
      %30 = vector.broadcast %cst_15 : f32 to vector<16x1xf32>
      %31 = arith.addf %28, %30 : vector<16x1xf32>
      %32 = math.rsqrt %31 : vector<16x1xf32>
      %33 = arith.mulf %29, %32 : vector<16x1xf32>
      %c0_16 = arith.constant 0 : index
      %c0_17 = arith.constant 0 : index
      %34 = vector.load %arg12[%c0_16, %c0_17] : memref<16x1xf32, #tpu.memory_space<vmem>>, vector<16x1xf32>
      tpu.vector_store %arg12[%c0_16, %c0_17], %33 {strides = array<i32>} : memref<16x1xf32, #tpu.memory_space<vmem>>, vector<16x1xf32>,
      %c0_18 = arith.constant 0 : index
      %c1 = arith.constant 1 : index
      %35 = vector.load %arg5[%c0_18, %c1] : memref<16x2xf32, #tpu.memory_space<vmem>>, vector<16x1xf32>
      %36 = arith.mulf %21, %33 : vector<16x1xf32>
      %37 = arith.subf %35, %36 : vector<16x1xf32>
      %c0_19 = arith.constant 0 : index
      %c0_20 = arith.constant 0 : index
      %38 = vector.load %arg13[%c0_19, %c0_20] : memref<16x1xf32, #tpu.memory_space<vmem>>, vector<16x1xf32>
      tpu.vector_store %arg13[%c0_19, %c0_20], %37 {strides = array<i32>} : memref<16x1xf32, #tpu.memory_space<vmem>>, vector<16x1xf32>,
    } else {
    }
    %c1_i32_6 = arith.constant 1 : i32
    %13 = arith.cmpi eq, %arg0, %c1_i32_6 : i32
    %14 = arith.extui %13 : i1 to i32
    %c0_i32_7 = arith.constant 0 : i32
    %15 = arith.cmpi ne, %14, %c0_i32_7 : i32
    scf.if %15 {
      %16 = arith.index_cast %arg1 : i32 to index
      %c0 = arith.constant 0 : index
      %c0_8 = arith.constant 0 : index
      %17 = vector.load %arg9[%16, %c0, %c0_8] : memref<1x16x128xf32, #tpu.memory_space<vmem>>, vector<1x16x128xf32>
      %18 = vector.shape_cast %17 : vector<1x16x128xf32> to vector<16x128xf32>
      %c0_9 = arith.constant 0 : index
      %c0_10 = arith.constant 0 : index
      %19 = vector.load %arg12[%c0_9, %c0_10] : memref<16x1xf32, #tpu.memory_space<vmem>>, vector<16x1xf32>
      %20 = vector.broadcast %19 : vector<16x1xf32> to vector<16x128xf32>
      %21 = arith.mulf %18, %20 : vector<16x128xf32>
      %c0_11 = arith.constant 0 : index
      %c0_12 = arith.constant 0 : index
      %22 = vector.load %arg13[%c0_11, %c0_12] : memref<16x1xf32, #tpu.memory_space<vmem>>, vector<16x1xf32>
      %23 = vector.broadcast %22 : vector<16x1xf32> to vector<16x128xf32>
      %24 = arith.addf %21, %23 : vector<16x128xf32>
      %cst = arith.constant 0.000000e+00 : f32
      %25 = vector.broadcast %cst : f32 to vector<16x128xf32>
      %26 = arith.maximumf %24, %25 : vector<16x128xf32>
      %c0_13 = arith.constant 0 : index
      %c0_14 = arith.constant 0 : index
      %27 = vector.load %arg6[%c0_13, %c0_14] : memref<1x16xf32, #tpu.memory_space<vmem>>, vector<1x16xf32>
      %cst_15 = arith.constant dense<0.000000e+00> : vector<1x128xf32>
      %28 = tpu.matmul %27, %26, %cst_15 {dimension_numbers = #tpu.dot_dimension_numbers<[1], [0], [0], [1], [0, 0, 1, 1], [], []>} : vector<1x16xf32>, vector<16x128xf32>, vector<1x128xf32> -> vector<1x128xf32>
      %c0_16 = arith.constant 0 : index
      %c0_17 = arith.constant 0 : index
      %29 = vector.load %arg7[%c0_16, %c0_17] : memref<1x1xf32, #tpu.memory_space<vmem>>, vector<1x1xf32>
      %30 = vector.broadcast %29 : vector<1x1xf32> to vector<1x128xf32>
      %31 = arith.addf %28, %30 : vector<1x128xf32>
      %c0_18 = arith.constant 0 : index
      %c0_19 = arith.constant 0 : index
      %32 = vector.load %arg8[%c0_18, %c0_19] : memref<1x128xf32, #tpu.memory_space<vmem>>, vector<1x128xf32>
      tpu.vector_store %arg8[%c0_18, %c0_19], %31 {strides = array<i32>} : memref<1x128xf32, #tpu.memory_space<vmem>>, vector<1x128xf32>,
    } else {
    }
    return
  }
  func.func @transform_0(%arg0: i32, %arg1: i32, %arg2: memref<1xi32, #tpu.memory_space<smem>>) -> (i32, i32) {
    %c1_i32 = arith.constant 1 : i32
    %0 = arith.subi %c1_i32, %arg0 : i32
    %1 = arith.muli %arg1, %0 : i32
    %c0_i32 = arith.constant 0 : i32
    %c0_i32_0 = arith.constant 0 : i32
    return %1, %c0_i32 : i32, i32
  }
  func.func @transform_1(%arg0: i32, %arg1: i32, %arg2: memref<1xi32, #tpu.memory_space<smem>>) -> (i32, i32) {
    %c0_i32 = arith.constant 0 : i32
    %c0_i32_0 = arith.constant 0 : i32
    %c0_i32_1 = arith.constant 0 : i32
    return %c0_i32, %c0_i32_0 : i32, i32
  }
  func.func @transform_2(%arg0: i32, %arg1: i32, %arg2: memref<1xi32, #tpu.memory_space<smem>>) -> (i32, i32) {
    %c0_i32 = arith.constant 0 : i32
    %c0_i32_0 = arith.constant 0 : i32
    %c0_i32_1 = arith.constant 0 : i32
    return %c0_i32, %c0_i32_0 : i32, i32
  }
  func.func @transform_3(%arg0: i32, %arg1: i32, %arg2: memref<1xi32, #tpu.memory_space<smem>>) -> (i32, i32) {
    %c0_i32 = arith.constant 0 : i32
    %c0_i32_0 = arith.constant 0 : i32
    %c0_i32_1 = arith.constant 0 : i32
    return %c0_i32, %c0_i32_0 : i32, i32
  }
  func.func @transform_4(%arg0: i32, %arg1: i32, %arg2: memref<1xi32, #tpu.memory_space<smem>>) -> (i32, i32) {
    %c0_i32 = arith.constant 0 : i32
    %c0_i32_0 = arith.constant 0 : i32
    %c0_i32_1 = arith.constant 0 : i32
    return %c0_i32, %c0_i32_0 : i32, i32
  }
  func.func @transform_5(%arg0: i32, %arg1: i32, %arg2: memref<1xi32, #tpu.memory_space<smem>>) -> (i32, i32) {
    %0 = arith.muli %arg1, %arg0 : i32
    %c0_i32 = arith.constant 0 : i32
    %c0_i32_0 = arith.constant 0 : i32
    return %c0_i32, %0 : i32, i32
  }
}

</mosaic_0001>

<llo_original>
// kernel: tpu_custom_call.1
$region0: #{tpu_custom_call.1}
  #allocation0 [shape = 'u32[]', space=smem, size = 0x4, offset = 0x4, fixed_abs, tag = 'smem constant byte address 0x4 - core index']
  #allocation1 [shape = 'u32[144,128]{1,0:T(1,128)}', space=vmem, size = 0x12000, scoped, tag = 'internal scratch']
  #allocation2 [shape = 'f32[1,16,128]{2,1,0:T(8,128)}', space=vmem, size = 0x2000, scoped, tag = 'scratch operand']
  #allocation3 [shape = 'f32[16,1]{1,0:T(8,128)}', space=vmem, size = 0x2000, scoped, tag = 'scratch operand']
  #allocation4 [shape = 'f32[16,1]{1,0:T(8,128)}', space=vmem, size = 0x2000, scoped, tag = 'scratch operand']
  #allocation5 [shape = 'f32[16,1]{1,0:T(8,128)}', space=vmem, size = 0x2000, scoped, tag = 'scratch operand']
  #allocation6 [shape = 'f32[16,1]{1,0:T(8,128)}', space=vmem, size = 0x2000, scoped, tag = 'scratch operand']
  #allocation7 [shape = 's32[1]{0}', space=sflag, size = 0x4, scoped, tag = 'scoped memory for tpu_custom_call.1']
  #allocation8 [shape = 's32[1]{0:T(128)S(6)}', space=smem, size = 0x200, scoped, tag = 'prefetched SMEM operand 0']
  #allocation9 [shape = 'f32[1,1]{1,0:T(1,128)S(1)}', space=vmem, size = 0x200, scoped, tag = 'scoped memory for tpu_custom_call.1']
  %s0 = inlined_call_operand.<no memory space> [shape: s32[1], index: 0, kind: input, shape index: {}]
  %s1 = inlined_call_operand.vmem [shape: f32[128,32], index: 1, kind: input, shape index: {}]
  %s2 = inlined_call_operand.vmem [shape: f32[16,32], index: 2, kind: input, shape index: {}]
  %s3 = inlined_call_operand.vmem [shape: f32[16,2], index: 3, kind: input, shape index: {}]
  %s4 = inlined_call_operand.vmem [shape: f32[1,16], index: 4, kind: input, shape index: {}]
  %s5 = inlined_call_operand.<no memory space> [shape: f32[1,1], index: 5, kind: input, shape index: {}]
  %s6 = inlined_call_operand.hbm [shape: f32[1,128], index: 6, kind: output, shape index: {}]
  %s7 = sld [smem:[#allocation0]]
  $region69: #{tpu_custom_call.1} parent=0
    _
  %s9 = ssub.s32 1, %s7
  %s10 = scalar_select 0, %s9, %s7
  %11 = sst [smem:[#allocation8]] %s0
  %v12 = vstv %s5
  %13 = vst [vmem:[#allocation9] sm:$0x1] %v12
  $region1: #{tpu_custom_call.1} parent=0
    #allocation10 [shape = 'u8[1024]{0}', space=vmem, size = 0x400, scoped, tag = 'output window, operand 0']
    #allocation11 [shape = 's32[2]{0}', space=sflag, size = 0x8, scoped, tag = 'scoped memory for tpu_custom_call.1']
    %14 = vsyncpa [#allocation11], 0
    %s15 = scalar_lea.sflag [#allocation11], 1
    %16 = vsyncpa %s15, 0
    loop: start=0, step=1, limit=4
    $region2: #{tpu_custom_call.1} parent=1 // loop_pre_header
      _
    $region3: #{tpu_custom_call.1} parent=1 // loop_header
      %s18 = sphi 0, %s22
      %p19 = scmp.ge.s32.totalorder %s18, 4
      %s25 = sphi 0, %s37
      %s26 = sphi 0, %s33
      %s27 = sphi 0, %s25
      %s28 = sphi 0, %s26
      %s29 = sphi 0, %s27
      %s30 = sphi 0, %s28
      %s44 = sphi 0, %s46
      %s47 = sphi 0, %s44
      %s48 = sphi 0, %s47
      %s64 = sphi 0, %s48
      %s68 = sphi 0, %s68
      %s70 = sphi 0, %s68
      %s71 = sphi 0, %s70
      %s85 = sphi 0, %s71
      %s89 = sphi 0, %s89
      %s91 = sphi 0, %s89
      %s92 = sphi 0, %s91
      %s106 = sphi 0, %s92
      %s110 = sphi 0, %s110
      %s112 = sphi 0, %s110
      %s113 = sphi 0, %s112
      %s127 = sphi 0, %s113
      %s131 = sphi 0, %s131
      %s133 = sphi 0, %s131
      %s134 = sphi 0, %s133
      %s148 = sphi 0, %s134
      %s156 = sphi 0, %s158
      %s159 = sphi 0, %s156
      %s160 = sphi 0, %s159
      %s176 = sphi 0, %s160
    $region4: #{tpu_custom_call.1} parent=1 // loop_header_branch
      %21 = sbr.rel (%p19) target = $region8
    $region5: #{tpu_custom_call.1} parent=1 // loop_body
      %s23 = ssub.s32 %s18, 1
      %s24 = ssub.s32 %s18, 2
      %s31 = sadd.s32 1, %s26
      %p32 = scmp.ge.s32.totalorder %s31, 1
      %s33 = scalar_select %p32, 0, %s31
      %s34 = sadd.s32 1, %s25
      %s35 = scalar_select %p32, %s34, %s25
      %p36 = scmp.ge.s32.totalorder %s35, 2
      %s37 = scalar_select %p36, 0, %s35
      %s38 = ssub.s32 1, %s25
      %s39 = smul.u32 %s26, %s38
      %s40 = ssub.s32 1, %s37
      %s41 = smul.u32 %s33, %s40
      %s42 = ssub.s32 %s39, %s41
      %p43 = scmp.eq.s32.totalorder %s42, 0
      %s45 = sadd.s32 %s44, 1
      %s46 = scalar_select %p43, %s44, %s45
      %p49 = pneg %p43
      %p50 = scmp.eq.s32.totalorder %s18, 1
      %p51 = por %p49, %p50
      %p52 = scmp.ne.s32.totalorder %s44, %s47
      %p53 = scmp.eq.s32.totalorder %s18, 0
      %p54 = por %p52, %p53
      %p55 = scmp.ne.s32.totalorder %s44, %s47
      %p56 = scmp.eq.s32.totalorder %s23, 1
      %p57 = por %p55, %p56
      %p58 = scmp.ne.s32.totalorder %s47, %s48
      %p59 = scmp.eq.s32.totalorder %s23, 0
      %p60 = por %p58, %p59
      %p61 = scmp.ne.s32.totalorder %s47, %s48
      %p62 = scmp.eq.s32.totalorder %s24, 1
      %p63 = por %p61, %p62
      %p65 = scmp.ne.s32.totalorder %s48, %s64
      %p66 = scmp.eq.s32.totalorder %s24, 0
      %p67 = por %p65, %p66
      %s69 = sadd.s32 %s68, 1
      %p72 = scmp.eq.s32.totalorder %s18, 1
      %p73 = scmp.ne.s32.totalorder %s68, %s70
      %p74 = scmp.eq.s32.totalorder %s18, 0
      %p75 = por %p73, %p74
      %p76 = scmp.ne.s32.totalorder %s68, %s70
      %p77 = scmp.eq.s32.totalorder %s23, 1
      %p78 = por %p76, %p77
      %p79 = scmp.ne.s32.totalorder %s70, %s71
      %p80 = scmp.eq.s32.totalorder %s23, 0
      %p81 = por %p79, %p80
      %p82 = scmp.ne.s32.totalorder %s70, %s71
      %p83 = scmp.eq.s32.totalorder %s24, 1
      %p84 = por %p82, %p83
      %p86 = scmp.ne.s32.totalorder %s71, %s85
      %p87 = scmp.eq.s32.totalorder %s24, 0
      %p88 = por %p86, %p87
      %s90 = sadd.s32 %s89, 1
      %p93 = scmp.eq.s32.totalorder %s18, 1
      %p94 = scmp.ne.s32.totalorder %s89, %s91
      %p95 = scmp.eq.s32.totalorder %s18, 0
      %p96 = por %p94, %p95
      %p97 = scmp.ne.s32.totalorder %s89, %s91
      %p98 = scmp.eq.s32.totalorder %s23, 1
      %p99 = por %p97, %p98
      %p100 = scmp.ne.s32.totalorder %s91, %s92
      %p101 = scmp.eq.s32.totalorder %s23, 0
      %p102 = por %p100, %p101
      %p103 = scmp.ne.s32.totalorder %s91, %s92
      %p104 = scmp.eq.s32.totalorder %s24, 1
      %p105 = por %p103, %p104
      %p107 = scmp.ne.s32.totalorder %s92, %s106
      %p108 = scmp.eq.s32.totalorder %s24, 0
      %p109 = por %p107, %p108
      %s111 = sadd.s32 %s110, 1
      %p114 = scmp.eq.s32.totalorder %s18, 1
      %p115 = scmp.ne.s32.totalorder %s110, %s112
      %p116 = scmp.eq.s32.totalorder %s18, 0
      %p117 = por %p115, %p116
      %p118 = scmp.ne.s32.totalorder %s110, %s112
      %p119 = scmp.eq.s32.totalorder %s23, 1
      %p120 = por %p118, %p119
      %p121 = scmp.ne.s32.totalorder %s112, %s113
      %p122 = scmp.eq.s32.totalorder %s23, 0
      %p123 = por %p121, %p122
      %p124 = scmp.ne.s32.totalorder %s112, %s113
      %p125 = scmp.eq.s32.totalorder %s24, 1
      %p126 = por %p124, %p125
      %p128 = scmp.ne.s32.totalorder %s113, %s127
      %p129 = scmp.eq.s32.totalorder %s24, 0
      %p130 = por %p128, %p129
      %s132 = sadd.s32 %s131, 1
      %p135 = scmp.eq.s32.totalorder %s18, 1
      %p136 = scmp.ne.s32.totalorder %s131, %s133
      %p137 = scmp.eq.s32.totalorder %s18, 0
      %p138 = por %p136, %p137
      %p139 = scmp.ne.s32.totalorder %s131, %s133
      %p140 = scmp.eq.s32.totalorder %s23, 1
      %p141 = por %p139, %p140
      %p142 = scmp.ne.s32.totalorder %s133, %s134
      %p143 = scmp.eq.s32.totalorder %s23, 0
      %p144 = por %p142, %p143
      %p145 = scmp.ne.s32.totalorder %s133, %s134
      %p146 = scmp.eq.s32.totalorder %s24, 1
      %p147 = por %p145, %p146
      %p149 = scmp.ne.s32.totalorder %s134, %s148
      %p150 = scmp.eq.s32.totalorder %s24, 0
      %p151 = por %p149, %p150
      %s152 = smul.u32 %s26, %s25
      %s153 = smul.u32 %s33, %s37
      %s154 = ssub.s32 %s152, %s153
      %p155 = scmp.eq.s32.totalorder %s154, 0
      %s157 = sadd.s32 %s156, 1
      %s158 = scalar_select %p155, %s156, %s157
      %p161 = pneg %p155
      %p162 = scmp.eq.s32.totalorder %s18, 1
      %p163 = por %p161, %p162
      %p164 = scmp.ne.s32.totalorder %s156, %s159
      %p165 = scmp.eq.s32.totalorder %s18, 0
      %p166 = por %p164, %p165
      %p167 = scmp.ne.s32.totalorder %s156, %s159
      %p168 = scmp.eq.s32.totalorder %s23, 1
      %p169 = por %p167, %p168
      %p170 = scmp.ne.s32.totalorder %s159, %s160
      %p171 = scmp.eq.s32.totalorder %s23, 0
      %p172 = por %p170, %p171
      %p173 = scmp.ne.s32.totalorder %s159, %s160
      %p174 = scmp.eq.s32.totalorder %s24, 1
      %p175 = por %p173, %p174
      %p177 = scmp.ne.s32.totalorder %s160, %s176
      %p178 = scmp.eq.s32.totalorder %s24, 0
      %p179 = por %p177, %p178
      %p180 = scmp.le.s32.totalorder 1, %s18
      %p181 = scmp.lt.s32.totalorder %s18, 3
      %p182 = pnand %p180, %p181
      %p183 = pneg %p182
      // Predicated region
      $region9: #{tpu_custom_call.1} parent=5 // pred_check
        _
      $region10: #{tpu_custom_call.1} parent=5 // pred_check_branch
        %185 = sbr.rel (%p182) target = $region12
      $region11: #{tpu_custom_call.1} parent=5 // pred_region
        %s186 = ssub.s32 %s18, 1
        // Predicated region
        $region13: #{tpu_custom_call.1} parent=11 // pred_check
          %p187 = pneg %p81
        $region14: #{tpu_custom_call.1} parent=11 // pred_check_branch
          %189 = sbr.rel (%p187) target = $region16
        $region15: #{tpu_custom_call.1} parent=11 // pred_region
          _
        $region16: #{tpu_custom_call.1} parent=11 // pred_fallthru
          _
        // Predicated region
        $region17: #{tpu_custom_call.1} parent=11 // pred_check
          %p190 = pneg %p102
        $region18: #{tpu_custom_call.1} parent=11 // pred_check_branch
          %192 = sbr.rel (%p190) target = $region20
        $region19: #{tpu_custom_call.1} parent=11 // pred_region
          _
        $region20: #{tpu_custom_call.1} parent=11 // pred_fallthru
          _
        // Predicated region
        $region21: #{tpu_custom_call.1} parent=11 // pred_check
          %p193 = pneg %p123
        $region22: #{tpu_custom_call.1} parent=11 // pred_check_branch
          %195 = sbr.rel (%p193) target = $region24
        $region23: #{tpu_custom_call.1} parent=11 // pred_region
          _
        $region24: #{tpu_custom_call.1} parent=11 // pred_fallthru
          _
        // Predicated region
        $region25: #{tpu_custom_call.1} parent=11 // pred_check
          %p196 = pneg %p144
        $region26: #{tpu_custom_call.1} parent=11 // pred_check_branch
          %198 = sbr.rel (%p196) target = $region28
        $region27: #{tpu_custom_call.1} parent=11 // pred_region
          _
        $region28: #{tpu_custom_call.1} parent=11 // pred_fallthru
          _
      $region12: #{tpu_custom_call.1} parent=5 // pred_fallthru
        _
      %p199 = scmp.lt.s32.totalorder %s18, 2
      // Predicated region
      $region29: #{tpu_custom_call.1} parent=5 // pred_check
        %p200 = pneg %p199
      $region30: #{tpu_custom_call.1} parent=5 // pred_check_branch
        %202 = sbr.rel (%p200) target = $region32
      $region31: #{tpu_custom_call.1} parent=5 // pred_region
        // Predicated region
        $region33: #{tpu_custom_call.1} parent=31 // pred_check
          %p203 = pneg %p54
        $region34: #{tpu_custom_call.1} parent=31 // pred_check_branch
          %205 = sbr.rel (%p203) target = $region36
        $region35: #{tpu_custom_call.1} parent=31 // pred_region
          %s206 = ssub.s32 1, %s25
          %s207 = smul.u32 %s26, %s206
          %s208 = smul.u32 16, %s207
          %p209 = scmp.lt.s32.totalorder %s208, 15
          %s210 = scalar_select %p209, %s208, 15
          %s211 = smul.addr %s210, 8
          %s212 = scalar_lea.vmem %s1, %s211
          %s213 = ssub.s32 1, %s25
          %s214 = smul.u32 %s26, %s213
          %s215 = smul.u32 16, %s214
        $region36: #{tpu_custom_call.1} parent=31 // pred_fallthru
          _
      $region32: #{tpu_custom_call.1} parent=5 // pred_fallthru
        _
      %p216 = scmp.le.s32.totalorder 1, %s18
      %p217 = scmp.lt.s32.totalorder %s18, 3
      %p218 = pnand %p216, %p217
      %p219 = pneg %p218
      // Predicated region
      $region37: #{tpu_custom_call.1} parent=5 // pred_check
        _
      $region38: #{tpu_custom_call.1} parent=5 // pred_check_branch
        %221 = sbr.rel (%p218) target = $region40
      $region39: #{tpu_custom_call.1} parent=5 // pred_region
        %s222 = ssub.s32 %s18, 1
        %s223 = ssub.s32 1, %s27
        %s224 = smul.u32 %s28, %s223
        %s225 = smul.u32 16, %s224
        %p226 = scmp.lt.s32.totalorder %s225, 15
        %s227 = scalar_select %p226, %s225, 15
        %s228 = smul.addr %s227, 8
        %s229 = scalar_lea.vmem %s1, %s228
        %p230 = pneg %p60
        %p231 = pneg %p57
        %p232 = pneg %p81
        %p233 = pneg %p78
        %p234 = pneg %p102
        %p235 = pneg %p99
        %p236 = pneg %p123
        %p237 = pneg %p120
        %p238 = pneg %p144
        %p239 = pneg %p141
        %p240 = pneg %p172
        %p241 = pneg %p169
        %s242 = sand.u32 %s159, 1
        %s243 = scalar_lea.sflag [#allocation11], %s242
        %s244 = sand.u32 %s159, 1
        %s245 = scalar_lea.vmem [#allocation10], %s244
        %s246 = ssub.s32 1, %s27
        %s247 = smul.u32 %s28, %s246
        %s248 = smul.u32 16, %s247
        %p249 = scmp.lt.s32.totalorder %s248, 15
        %s250 = scalar_select %p249, %s248, 15
        %s251 = smul.addr %s250, 8
        %s252 = scalar_lea.vmem %s1, %s251
        %s253 = ssub.s32 1, %s27
        %s254 = smul.u32 %s28, %s253
        %s255 = smul.u32 16, %s254
        %s256 = smul.u32 %s28, %s27
        %p257 = scmp.eq.s32.totalorder %s27, 0
        %p258 = scmp.eq.s32.totalorder %s28, 0
        %p259 = pnand %p257, %p258
        %p260 = pneg %p259
        // Predicated region
        $region41: #{tpu_custom_call.1} parent=39 // pred_check
          _
        $region42: #{tpu_custom_call.1} parent=39 // pred_check_branch
          %262 = sbr.rel (%p259) target = $region44
        $region43: #{tpu_custom_call.1} parent=39 // pred_region
          %vm263 = vcmask 7168
          %264 = vst.msk [vmem:[#allocation3] sm:$0xff] %vm263, 0.0
          %265 = vst.msk [vmem:[#allocation3 + $0x8] sm:$0xff] %vm263, 0.0
          %266 = vst.msk [vmem:[#allocation4] sm:$0xff] %vm263, 0.0
          %267 = vst.msk [vmem:[#allocation4 + $0x8] sm:$0xff] %vm263, 0.0
        $region44: #{tpu_custom_call.1} parent=39 // pred_fallthru
          _
        // Predicated region
        $region45: #{tpu_custom_call.1} parent=39 // pred_check
          %p268 = pneg %p257
        $region46: #{tpu_custom_call.1} parent=39 // pred_check_branch
          %270 = sbr.rel (%p268) target = $region48
        $region47: #{tpu_custom_call.1} parent=39 // pred_region
          %v271 = vld [vmem:[%s2] sm:$0xff]
          %v272 = vld [vmem:[%s2 + $0x8] sm:$0xff]
          %v273 = vld [vmem:[%s252] sm:$0xff]
          %v274 = vld [vmem:[%s252 + $0x8] sm:$0xff]
          %v275 = vld [vmem:[%s252 + $0x10] sm:$0xff]
          %v276 = vld [vmem:[%s252 + $0x18] sm:$0xff]
          %v277 = vld [vmem:[%s252 + $0x20] sm:$0xff]
          %v278 = vld [vmem:[%s252 + $0x28] sm:$0xff]
          %v279 = vld [vmem:[%s252 + $0x30] sm:$0xff]
          %v280 = vld [vmem:[%s252 + $0x38] sm:$0xff]
          %v281 = vld [vmem:[%s252 + $0x40] sm:$0xff]
          %v282 = vld [vmem:[%s252 + $0x48] sm:$0xff]
          %v283 = vld [vmem:[%s252 + $0x50] sm:$0xff]
          %v284 = vld [vmem:[%s252 + $0x58] sm:$0xff]
          %v285 = vld [vmem:[%s252 + $0x60] sm:$0xff]
          %v286 = vld [vmem:[%s252 + $0x68] sm:$0xff]
          %v287 = vld [vmem:[%s252 + $0x70] sm:$0xff]
          %v288 = vld [vmem:[%s252 + $0x78] sm:$0xff]
          %vm289 = vcmask 261120
          %v291 = vsel %vm289, %v271, 0
          %v294 = vsel %vm289, %v272, 0
          %v297 = vsel %vm289, %v273, 0
          %v300 = vsel %vm289, %v274, 0
          %v303 = vsel %vm289, %v275, 0
          %v306 = vsel %vm289, %v276, 0
          %v309 = vsel %vm289, %v277, 0
          %v312 = vsel %vm289, %v278, 0
          %v315 = vsel %vm289, %v279, 0
          %v318 = vsel %vm289, %v280, 0
          %v321 = vsel %vm289, %v281, 0
          %v324 = vsel %vm289, %v282, 0
          %v327 = vsel %vm289, %v283, 0
          %v330 = vsel %vm289, %v284, 0
          %v333 = vsel %vm289, %v285, 0
          %v336 = vsel %vm289, %v286, 0
          %v339 = vsel %vm289, %v287, 0
          %v342 = vsel %vm289, %v288, 0
          %344 = vmatprep.subr.mxu0 0.0
          %345 = vmatpush1.xpose.msra.mxu0 %v297
          %346 = vmatprep.subr.mxu0 0.0
          %347 = vmatpush1.xpose.msra.mxu0 %v300
          %348 = vmatprep.subr.mxu0 0.0
          %349 = vmatpush1.xpose.msra.mxu0 %v303
          %350 = vmatprep.subr.mxu0 0.0
          %351 = vmatpush1.xpose.msra.mxu0 %v306
          %352 = vmatprep.subr.mxu0 0.0
          %353 = vmatpush1.xpose.msra.mxu0 %v309
          %354 = vmatprep.subr.mxu0 0.0
          %355 = vmatpush1.xpose.msra.mxu0 %v312
          %356 = vmatprep.subr.mxu0 0.0
          %357 = vmatpush1.xpose.msra.mxu0 %v315
          %358 = vmatprep.subr.mxu0 0.0
          %359 = vmatpush1.xpose.msra.mxu0 %v318
          %360 = vmatprep.subr.mxu0 0.0
          %361 = vmatpush1.xpose.msra.mxu0 %v321
          %362 = vmatprep.subr.mxu0 0.0
          %363 = vmatpush1.xpose.msra.mxu0 %v324
          %364 = vmatprep.subr.mxu0 0.0
          %365 = vmatpush1.xpose.msra.mxu0 %v327
          %366 = vmatprep.subr.mxu0 0.0
          %367 = vmatpush1.xpose.msra.mxu0 %v330
          %368 = vmatprep.subr.mxu0 0.0
          %369 = vmatpush1.xpose.msra.mxu0 %v333
          %370 = vmatprep.subr.mxu0 0.0
          %371 = vmatpush1.xpose.msra.mxu0 %v336
          %372 = vmatprep.subr.mxu0 0.0
          %373 = vmatpush1.xpose.msra.mxu0 %v339
          %374 = vmatprep.subr.mxu0 0.0
          %375 = vmatpush1.xpose.msra.mxu0 %v342
          %376 = vmatprep.subr.mxu0 0.0
          %377 = vmatpush1.xpose.msra.mxu0 0.0
          %378 = vmatprep.subr.mxu0 0.0
          %379 = vmatpush1.xpose.msra.mxu0 0.0
          %380 = vmatprep.subr.mxu0 0.0
          %381 = vmatpush1.xpose.msra.mxu0 0.0
          %382 = vmatprep.subr.mxu0 0.0
          %383 = vmatpush1.xpose.msra.mxu0 0.0
          %384 = vmatprep.subr.mxu0 0.0
          %385 = vmatpush1.xpose.msra.mxu0 0.0
          %386 = vmatprep.subr.mxu0 0.0
          %387 = vmatpush1.xpose.msra.mxu0 0.0
          %388 = vmatprep.subr.mxu0 0.0
          %389 = vmatpush1.xpose.msra.mxu0 0.0
          %390 = vmatprep.subr.mxu0 0.0
          %391 = vmatpush1.xpose.msra.mxu0 0.0
          %392 = vmatprep.subr.mxu0 0.0
          %393 = vmatpush1.xpose.msra.mxu0 0.0
          %394 = vmatprep.subr.mxu0 0.0
          %395 = vmatpush1.xpose.msra.mxu0 0.0
          %396 = vmatprep.subr.mxu0 0.0
          %397 = vmatpush1.xpose.msra.mxu0 0.0
          %398 = vmatprep.subr.mxu0 0.0
          %399 = vmatpush1.xpose.msra.mxu0 0.0
          %400 = vmatprep.subr.mxu0 0.0
          %401 = vmatpush1.xpose.msra.mxu0 0.0
          %402 = vmatprep.subr.mxu0 0.0
          %403 = vmatpush1.xpose.msra.mxu0 0.0
          %404 = vmatprep.subr.mxu0 0.0
          %405 = vmatpush1.xpose.msra.mxu0 0.0
          %406 = vmatprep.subr.mxu0 0.0
          %407 = vmatpush1.xpose.msra.mxu0 0.0
          %408 = vmatprep.mubr.f32.mxu0 0.0
          %409 = vmatmul.mubr.f32.gmra.mrb[0].mxu0 %v291
          %v410 = vpop.f32.mrb[0].mxu0
          %v411 = vadd.f32 0.0, %v410
          %v412 = vpop.f32.mrb[0].mxu0
          %413 = vmatprep.mubr.f32.mxu0 0.0
          %414 = vmatmul.mubr.f32.gmra.mrb[0].mxu0 %v294
          %v415 = vpop.f32.mrb[0].mxu0
          %v416 = vadd.f32 0.0, %v415
          %v417 = vpop.f32.mrb[0].mxu0
          %418 = vdwg.mxu0
          %s419 = smul.u32 %s28, 16
          %s420 = scalar_lea.vmem [#allocation2], %s419
          %421 = vst [vmem:[%s420] sm:$0xff] %v411
          %422 = vst [vmem:[%s420 + $0x8] sm:$0xff] %v416
          %v423 = vld [vmem:[#allocation3] sm:$0xff]
          %v424 = vld [vmem:[#allocation3 + $0x8] sm:$0xff]
          %425 = vadd.xlane.f32.xlu0 %v411
          %v426 = vpop.xlane.xlu0 %425
          %427 = vadd.xlane.f32.xlu0 %v416
          %v428 = vpop.xlane.xlu0 %427
          %v429 = vadd.f32 %v423, %v426
          %v430 = vadd.f32 %v424, %v428
          %vm431 = vcmask 7168
          %432 = vst.msk [vmem:[#allocation3] sm:$0xff] %vm431, %v429
          %433 = vst.msk [vmem:[#allocation3 + $0x8] sm:$0xff] %vm431, %v430
          %v434 = vld [vmem:[#allocation4] sm:$0xff]
          %v435 = vld [vmem:[#allocation4 + $0x8] sm:$0xff]
          %v436 = vmul.f32 %v411, %v411
          %v437 = vmul.f32 %v416, %v416
          %438 = vadd.xlane.f32.xlu0 %v436
          %v439 = vpop.xlane.xlu0 %438
          %440 = vadd.xlane.f32.xlu0 %v437
          %v441 = vpop.xlane.xlu0 %440
          %v442 = vadd.f32 %v434, %v439
          %v443 = vadd.f32 %v435, %v441
          %444 = vst.msk [vmem:[#allocation4] sm:$0xff] %vm431, %v442
          %445 = vst.msk [vmem:[#allocation4 + $0x8] sm:$0xff] %vm431, %v443
        $region48: #{tpu_custom_call.1} parent=39 // pred_fallthru
          _
        %p446 = scmp.eq.s32.totalorder %s27, 1
        %p447 = pnand %p446, %p258
        %p448 = pneg %p447
        // Predicated region
        $region49: #{tpu_custom_call.1} parent=39 // pred_check
          _
        $region50: #{tpu_custom_call.1} parent=39 // pred_check_branch
          %450 = sbr.rel (%p447) target = $region52
        $region51: #{tpu_custom_call.1} parent=39 // pred_region
          %s451 = sld [smem:[#allocation8]]
          %s452 = scvt.s32.f32 %s451
          %v453 = vstv %s452
          %v454 = vrcp.pop %v453
          %s455 = vtos %v454
          %v456 = vld [vmem:[#allocation3] sm:$0xff]
          %v457 = vld [vmem:[#allocation3 + $0x8] sm:$0xff]
          %v458 = vstv %s455
          %v459 = vmul.f32 %v456, %v458
          %v460 = vmul.f32 %v457, %v458
          %v461 = vld [vmem:[#allocation4] sm:$0xff]
          %v462 = vld [vmem:[#allocation4 + $0x8] sm:$0xff]
          %v463 = vmul.f32 %v461, %v458
          %v464 = vmul.f32 %v462, %v458
          %v465 = vmul.f32 %v459, %v459
          %v466 = vmul.f32 %v460, %v460
          %v467 = vsub.f32 %v463, %v465
          %v468 = vsub.f32 %v464, %v466
          %v469 = vmax.f32 %v467, 0.0
          %v470 = vmax.f32 %v468, 0.0
          %v471 = vld [vmem:[%s3] sm:$0xff]
          %v472 = vld [vmem:[%s3 + $0x8] sm:$0xff]
          %v473 = vadd.f32 %v469, 1e-05
          %v474 = vadd.f32 %v470, 1e-05
          %v475 = vrsqrt.pop %v473
          %v476 = vrsqrt.pop %v474
          %v477 = vmul.f32 %v471, %v475
          %v478 = vmul.f32 %v472, %v476
          %vm479 = vcmask 7168
          %480 = vst.msk [vmem:[#allocation5] sm:$0xff] %vm479, %v477
          %481 = vst.msk [vmem:[#allocation5 + $0x8] sm:$0xff] %vm479, %v478
          %v482 = vld [vmem:[%s3] sm:$0xff]
          %v483 = vld [vmem:[%s3 + $0x8] sm:$0xff]
          %v484 = vmul.f32 %v459, %v477
          %v485 = vmul.f32 %v460, %v478
          %488 = vrot.lane.b32.xlu0 %v484, 1
          %v489 = vpop.permute.xlu0 %488
          %490 = vrot.lane.b32.xlu0 %v485, 1
          %v491 = vpop.permute.xlu0 %490
          %v494 = vsub.f32 %v482, %v489
          %v495 = vsub.f32 %v483, %v491
          %498 = vrot.lane.b32.xlu0 %v494, 127
          %v499 = vpop.permute.xlu0 %498
          %500 = vrot.lane.b32.xlu0 %v495, 127
          %v501 = vpop.permute.xlu0 %500
          %504 = vst.msk [vmem:[#allocation6] sm:$0xff] %vm479, %v499
          %505 = vst.msk [vmem:[#allocation6 + $0x8] sm:$0xff] %vm479, %v501
        $region52: #{tpu_custom_call.1} parent=39 // pred_fallthru
          _
        // Predicated region
        $region53: #{tpu_custom_call.1} parent=39 // pred_check
          %p506 = pneg %p446
        $region54: #{tpu_custom_call.1} parent=39 // pred_check_branch
          %508 = sbr.rel (%p506) target = $region56
        $region55: #{tpu_custom_call.1} parent=39 // pred_region
          %s509 = smul.u32 %s28, 16
          %s510 = scalar_lea.vmem [#allocation2], %s509
          %v511 = vld [vmem:[%s510] sm:$0xff]
          %v512 = vld [vmem:[%s510 + $0x8] sm:$0xff]
          %v513 = vld [vmem:[#allocation5] sm:$0xff]
          %v514 = vld [vmem:[#allocation5 + $0x8] sm:$0xff]
          %516 = vset.pattern.permute.xlu0 0
          %517 = vperm.xlu0 %516, %v513
          %v518 = vpop.permute.xlu0 %517
          %521 = vset.pattern.permute.xlu0 0
          %522 = vperm.xlu0 %521, %v514
          %v523 = vpop.permute.xlu0 %522
          %v525 = vmul.f32 %v511, %v518
          %v526 = vmul.f32 %v512, %v523
          %v527 = vld [vmem:[#allocation6] sm:$0xff]
          %v528 = vld [vmem:[#allocation6 + $0x8] sm:$0xff]
          %530 = vset.pattern.permute.xlu0 0
          %531 = vperm.xlu0 %530, %v527
          %v532 = vpop.permute.xlu0 %531
          %535 = vset.pattern.permute.xlu0 0
          %536 = vperm.xlu0 %535, %v528
          %v537 = vpop.permute.xlu0 %536
          %v539 = vadd.f32 %v525, %v532
          %v540 = vadd.f32 %v526, %v537
          %v541 = vmax.f32 %v539, 0.0
          %v542 = vmax.f32 %v540, 0.0
          %v543 = vld [vmem:[%s4] sm:$0x1]
          %v544 = vld [vmem:[#allocation9] sm:$0x1]
          %546 = vset.pattern.permute.xlu0 0
          %547 = vperm.xlu0 %546, %v544
          %v548 = vpop.permute.xlu0 %547
          %v550 = vlaneseq
          %v551 = vshrl.u32 %v550, 7
          %v552 = vsub.s32 0, %v551
          %v553 = vrot.slane %v548, %v552
          %vm554 = vcmask 130048
          %v556 = vsel %vm554, %v543, 0
          %558 = vmatprep.subr.mxu0 0.0
          %559 = vmatpush1.msra.mxu0 %v541
          %560 = vmatprep.subr.mxu0 0.0
          %561 = vmatpush1.msra.mxu0 %v542
          %562 = vmatprep.subr.mxu0 0.0
          %563 = vmatpush1.msra.mxu0 0.0
          %564 = vmatprep.subr.mxu0 0.0
          %565 = vmatpush1.msra.mxu0 0.0
          %566 = vmatprep.subr.mxu0 0.0
          %567 = vmatpush1.msra.mxu0 0.0
          %568 = vmatprep.subr.mxu0 0.0
          %569 = vmatpush1.msra.mxu0 0.0
          %570 = vmatprep.subr.mxu0 0.0
          %571 = vmatpush1.msra.mxu0 0.0
          %572 = vmatprep.subr.mxu0 0.0
          %573 = vmatpush1.msra.mxu0 0.0
          %574 = vmatprep.subr.mxu0 0.0
          %575 = vmatpush1.msra.mxu0 0.0
          %576 = vmatprep.subr.mxu0 0.0
          %577 = vmatpush1.msra.mxu0 0.0
          %578 = vmatprep.subr.mxu0 0.0
          %579 = vmatpush1.msra.mxu0 0.0
          %580 = vmatprep.subr.mxu0 0.0
          %581 = vmatpush1.msra.mxu0 0.0
          %582 = vmatprep.subr.mxu0 0.0
          %583 = vmatpush1.msra.mxu0 0.0
          %584 = vmatprep.subr.mxu0 0.0
          %585 = vmatpush1.msra.mxu0 0.0
          %586 = vmatprep.subr.mxu0 0.0
          %587 = vmatpush1.msra.mxu0 0.0
          %588 = vmatprep.subr.mxu0 0.0
          %589 = vmatpush1.msra.mxu0 0.0
          %590 = vmatprep.subr.mxu0 0.0
          %591 = vmatpush1.msra.mxu0 0.0
          %592 = vmatprep.subr.mxu0 0.0
          %593 = vmatpush1.msra.mxu0 0.0
          %594 = vmatprep.subr.mxu0 0.0
          %595 = vmatpush1.msra.mxu0 0.0
          %596 = vmatprep.subr.mxu0 0.0
          %597 = vmatpush1.msra.mxu0 0.0
          %598 = vmatprep.subr.mxu0 0.0
          %599 = vmatpush1.msra.mxu0 0.0
          %600 = vmatprep.subr.mxu0 0.0
          %601 = vmatpush1.msra.mxu0 0.0
          %602 = vmatprep.subr.mxu0 0.0
          %603 = vmatpush1.msra.mxu0 0.0
          %604 = vmatprep.subr.mxu0 0.0
          %605 = vmatpush1.msra.mxu0 0.0
          %606 = vmatprep.subr.mxu0 0.0
          %607 = vmatpush1.msra.mxu0 0.0
          %608 = vmatprep.subr.mxu0 0.0
          %609 = vmatpush1.msra.mxu0 0.0
          %610 = vmatprep.subr.mxu0 0.0
          %611 = vmatpush1.msra.mxu0 0.0
          %612 = vmatprep.subr.mxu0 0.0
          %613 = vmatpush1.msra.mxu0 0.0
          %614 = vmatprep.subr.mxu0 0.0
          %615 = vmatpush1.msra.mxu0 0.0
          %616 = vmatprep.subr.mxu0 0.0
          %617 = vmatpush1.msra.mxu0 0.0
          %618 = vmatprep.subr.mxu0 0.0
          %619 = vmatpush1.msra.mxu0 0.0
          %620 = vmatprep.subr.mxu0 0.0
          %621 = vmatpush1.msra.mxu0 0.0
          %622 = vmatprep.mubr.f32.mxu0 0.0
          %623 = vmatmul.mubr.f32.gmra.mrb[0].mxu0 %v556
          %v624 = vpop.f32.mrb[0].mxu0
          %v625 = vadd.f32 %v553, %v624
          %v626 = vpop.f32.mrb[0].mxu0
          %627 = vdwg.mxu0
          %628 = vst [vmem:[%s245] sm:$0x1] %v625
        $region56: #{tpu_custom_call.1} parent=39 // pred_fallthru
          _
        %s629 = sand.u32 %s159, 1
        %s630 = scalar_lea.sflag [#allocation11], %s629
        %s631 = sand.u32 %s159, 1
        %s632 = scalar_lea.vmem [#allocation10], %s631
        // Predicated region
        $region57: #{tpu_custom_call.1} parent=39 // pred_check
          %p633 = pneg %p169
        $region58: #{tpu_custom_call.1} parent=39 // pred_check_branch
          %635 = sbr.rel (%p633) target = $region60
        $region59: #{tpu_custom_call.1} parent=39 // pred_region
          %s636 = smul.u32 %s28, %s27
          %s638 = ssub.s32 16, 16
          %639 = vsyncadd %s630, %s638
          %s640 = smul.addr %s636, 16
          %s641 = scalar_lea.hbm %s6, %s640
          %s643 = sshll.u32 %s632, 4
          %s644 = int_to_ptr.vmem [resolvable:$true] %s643
          %646 = dma.vmem_to_hbm [thread:$0]  %s644, 16, %s641, %s630
        $region60: #{tpu_custom_call.1} parent=39 // pred_fallthru
          _
      $region40: #{tpu_custom_call.1} parent=5 // pred_fallthru
        _
      %p647 = scmp.le.s32.totalorder 2, %s18
      // Predicated region
      $region61: #{tpu_custom_call.1} parent=5 // pred_check
        %p648 = pneg %p647
      $region62: #{tpu_custom_call.1} parent=5 // pred_check_branch
        %650 = sbr.rel (%p648) target = $region64
      $region63: #{tpu_custom_call.1} parent=5 // pred_region
        %s651 = ssub.s32 %s18, 2
        // Predicated region
        $region65: #{tpu_custom_call.1} parent=63 // pred_check
          %p652 = pneg %p175
        $region66: #{tpu_custom_call.1} parent=63 // pred_check_branch
          %654 = sbr.rel (%p652) target = $region68
        $region67: #{tpu_custom_call.1} parent=63 // pred_region
          %s655 = sand.u32 %s160, 1
          %s656 = scalar_lea.sflag [#allocation11], %s655
          %s657 = sand.u32 %s160, 1
          %s658 = scalar_lea.vmem [#allocation10], %s657
          %659 = dma.done %s656, 16
        $region68: #{tpu_custom_call.1} parent=63 // pred_fallthru
          _
      $region64: #{tpu_custom_call.1} parent=5 // pred_fallthru
        _
    $region6: #{tpu_custom_call.1} parent=1 // loop_footer
      %s22 = sadd.s32 1, %s18
    $region7: #{tpu_custom_call.1} parent=1 // loop_footer_branch
      %17 = sbr.rel target = $region3
    $region8: #{tpu_custom_call.1} parent=1 // loop_exit
      _
    %660 = vsyncpa [#allocation11], 1
    %s661 = scalar_lea.sflag [#allocation11], 1
    %662 = vsyncpa %s661, 1

</llo_original>
